<compile_context>
chip_gen: v6e
topology: v6e:2x2x1
jax: 0.10.0
libtpu: 0.0.40
codegen_flags: <defaults>
</compile_context>

<pallas_src>
import functools

import jax
import jax.numpy as jnp
from jax.experimental import pallas as pl
from jax.experimental.pallas import tpu as pltpu


def _conv3x3_relu_kernel(x_ref, rhs_ref, b_ref, o_ref, *, N, H, W, Cin, Cout):
    """Fused Conv2d(3x3, pad=1) + bias + ReLU for the whole batch.

    x_ref   : (N, H, W*Cin)        channels-last input, bf16 MXU operand
    rhs_ref : (W*Cin, 3*W*Cout)    three banded weight matrices, band dy at
                                   lane columns [dy*W*Cout, (dy+1)*W*Cout)
    b_ref   : (1, W*Cout)          bias tiled per output column, f32
    o_ref   : (N, H, W*Cout)       lane-dense output
    """
    Nc = W * Cout

    # One MXU push for all three dy bands; f32 accumulation.
    # Reshape only merges leading dims (second-minor stays a multiple of 8).
    lhs = x_ref[...].reshape(N * H, W * Cin)
    y = jnp.dot(lhs, rhs_ref[...], preferred_element_type=jnp.float32)
    y = y.reshape(N, H, 3 * Nc)

    # out[n, h] = y_dy0[n, h-1] + y_dy1[n, h] + y_dy2[n, h+1]   (zero at edges)
    # Band slices are 128-lane-aligned; the H shift is cheap sublane work on
    # the small f32 result (replaces the old 3x-input im2col scratch).
    zrow = jnp.zeros((N, 1, Nc), jnp.float32)
    up = jnp.concatenate([zrow, y[:, : H - 1, 0:Nc]], axis=1)          # dy = 0
    mid = y[:, :, Nc:2 * Nc]                                           # dy = 1
    down = jnp.concatenate([y[:, 1:, 2 * Nc:3 * Nc], zrow], axis=1)    # dy = 2

    acc = up + mid + down + b_ref[...].reshape(1, 1, Nc)
    o_ref[...] = jnp.maximum(acc, 0.0).astype(o_ref.dtype)


def _banded_weights(w_oihw, W, dtype):
    """OIHW (Cout, Cin, 3, 3) -> banded RHS of shape (W*Cin, 3*W*Cout).

    rhs[x'*Cin + ci, dy*W*Cout + w*Cout + co] = weight[co, ci, dy, x' - w + 1]
    when 0 <= x' - w + 1 < 3, else 0.  Column (dx) zero-padding is folded into
    the band mask, so the kernel needs no halo columns and no scratch.
    """
    Cout, Cin, KH, KW = w_oihw.shape
    w_hwio = jnp.transpose(w_oihw, (2, 3, 1, 0))            # (KH, KW, Cin, Cout)
    dx = jnp.arange(KW)[:, None, None]                       # tap index
    xp = jnp.arange(W)[None, :, None]                        # source column x'
    wc = jnp.arange(W)[None, None, :]                        # output column w
    sel = (xp == wc + dx - 1).astype(w_oihw.dtype)            # (KW, W, W)
    rhs = jnp.einsum('axw,yaio->xiywo', sel, w_hwio)          # (W, Cin, KH, W, Cout)
    return rhs.reshape(W * Cin, KH * W * Cout).astype(dtype)


def make_component_params(w_oihw, bias, W, compute_dtype=jnp.bfloat16):
    """Hoisted MXU-ready parameter prep: run once per weight update, not per
    forward call."""
    Cout = w_oihw.shape[0]
    rhs = _banded_weights(w_oihw, W, compute_dtype)           # (W*Cin, 3*W*Cout)
    b_tiled = jnp.tile(bias.astype(jnp.float32), W).reshape(1, W * Cout)
    return rhs, b_tiled


@functools.partial(jax.jit, static_argnames=("Cout",))
def component_forward_nhwc(x_nhwc, rhs, b_tiled, *, Cout):
    """Hot path: Conv2d(3x3, pad=1) + ReLU on channels-last input."""
    N, H, W, Cin = x_nhwc.shape
    Nc = W * Cout
    K = W * Cin

    # Cast activations to the MXU operand dtype (bf16); accumulation is f32.
    x_flat = x_nhwc.reshape(N, H, W * Cin).astype(rhs.dtype)

    out_flat = pl.pallas_call(
        functools.partial(_conv3x3_relu_kernel,
                          N=N, H=H, W=W, Cin=Cin, Cout=Cout),
        out_shape=jax.ShapeDtypeStruct((N, H, Nc), x_nhwc.dtype),
        grid_spec=pltpu.PrefetchScalarGridSpec(
            num_scalar_prefetch=0,
            grid=(1,),                      # whole batch: well under VMEM
            in_specs=[
                pl.BlockSpec((N, H, W * Cin), lambda i: (0, 0, 0)),
                pl.BlockSpec((K, 3 * Nc), lambda i: (0, 0)),
                pl.BlockSpec((1, Nc), lambda i: (0, 0)),
            ],
            out_specs=pl.BlockSpec((N, H, Nc), lambda i: (0, 0, 0)),
        ),
        compiler_params=pltpu.CompilerParams(
            dimension_semantics=("arbitrary",)),
    )(x_flat, rhs, b_tiled)

    return out_flat.reshape(N, H, W, Cout)


def component_forward(x_nchw, w_oihw, bias, *, compute_dtype=jnp.bfloat16):
    """Conv2d(Cin->Cout, 3x3, stride=1, padding=1) + ReLU.  NCHW in / NCHW out
    (PyTorch semantics).  For repeated calls with fixed weights, call
    `make_component_params` once and reuse it with `component_forward_nhwc`.
    """
    N, Cin, H, W = x_nchw.shape
    Cout = w_oihw.shape[0]
    rhs, b_tiled = make_component_params(w_oihw, bias, W, compute_dtype)
    x_nhwc = jnp.transpose(x_nchw, (0, 2, 3, 1))
    out_nhwc = component_forward_nhwc(x_nhwc, rhs, b_tiled, Cout=Cout)
    return jnp.transpose(out_nhwc, (0, 3, 1, 2))


if __name__ == "__main__":
    # Component.forward is abstract; the kernel implements the wrapped
    # feature-extractor pass (Conv2d(4,8,3,p=1)+ReLU), the only forward compute.
    key = jax.random.PRNGKey(0)
    k_x, k_w, k_b = jax.random.split(key, 3)

    N, Cin, H, W, Cout = 2, 4, 16, 16, 8
    x = jax.random.normal(k_x, (N, Cin, H, W), dtype=jnp.float32)
    w = jax.random.normal(k_w, (Cout, Cin, 3, 3), dtype=jnp.float32) * 0.1
    b = jax.random.normal(k_b, (Cout,), dtype=jnp.float32) * 0.01

    out = jax.block_until_ready(component_forward(x, w, b))
    assert out.shape == (N, Cout, H, W)

    # Reference with identical bf16 operand rounding, f32 accumulation.
    xq = x.astype(jnp.bfloat16).astype(jnp.float32)
    wq = w.astype(jnp.bfloat16).astype(jnp.float32)
    ref = jax.lax.conv_general_dilated(
        xq, wq, window_strides=(1, 1), padding=((1, 1), (1, 1)),
        dimension_numbers=("NCHW", "OIHW", "NCHW"))
    ref = jnp.maximum(ref + b[None, :, None, None], 0.0)
    assert jnp.allclose(out, ref, atol=1e-3, rtol=1e-3), \
        float(jnp.max(jnp.abs(out - ref)))

    # Sanity bound against the full-f32 reference (bf16 operand rounding only).
    ref_f32 = jax.lax.conv_general_dilated(
        x, w, window_strides=(1, 1), padding=((1, 1), (1, 1)),
        dimension_numbers=("NCHW", "OIHW", "NCHW"))
    ref_f32 = jnp.maximum(ref_f32 + b[None, :, None, None], 0.0)
    assert jnp.allclose(out, ref_f32, atol=3e-2, rtol=3e-2), \
        float(jnp.max(jnp.abs(out - ref_f32)))

    print("KERNEL_OK")
</pallas_src>

<mosaic_0001>
module attributes {stable_mosaic.version = 11 : i64} {
  func.func @_conv3x3_relu_kernel(%arg0: i32, %arg1: memref<2x16x64xbf16, #tpu.memory_space<vmem>>, %arg2: memref<64x384xbf16, #tpu.memory_space<vmem>>, %arg3: memref<1x128xf32, #tpu.memory_space<vmem>>, %arg4: memref<2x16x128xf32, #tpu.memory_space<vmem>>) attributes {dimension_semantics = [#tpu.dimension_semantics<arbitrary>], iteration_bounds = array<i64: 1>, scalar_prefetch = 0 : i64, scratch_operands = 0 : i64, tpu.core_type = #tpu.core_type<tc>, window_params = [{pipeline_mode = #tpu.pipeline_mode<synchronous>, transform_indices = @transform_0, window_bounds = array<i64: 2, 16, 64>}, {pipeline_mode = #tpu.pipeline_mode<synchronous>, transform_indices = @transform_1, window_bounds = array<i64: 64, 384>}, {pipeline_mode = #tpu.pipeline_mode<synchronous>, transform_indices = @transform_2, window_bounds = array<i64: 1, 128>}, {pipeline_mode = #tpu.pipeline_mode<synchronous>, transform_indices = @transform_3, window_bounds = array<i64: 2, 16, 128>}]} {
    %c0 = arith.constant 0 : index
    %c0_0 = arith.constant 0 : index
    %c0_1 = arith.constant 0 : index
    %0 = vector.load %arg1[%c0, %c0_0, %c0_1] : memref<2x16x64xbf16, #tpu.memory_space<vmem>>, vector<2x16x64xbf16>
    %1 = vector.shape_cast %0 : vector<2x16x64xbf16> to vector<32x64xbf16>
    %c0_2 = arith.constant 0 : index
    %c0_3 = arith.constant 0 : index
    %2 = vector.load %arg2[%c0_2, %c0_3] : memref<64x384xbf16, #tpu.memory_space<vmem>>, vector<64x384xbf16>
    %cst = arith.constant dense<0.000000e+00> : vector<32x384xf32>
    %3 = tpu.matmul %1, %2, %cst {dimension_numbers = #tpu.dot_dimension_numbers<[1], [0], [0], [1], [0, 0, 1, 1], [], []>} : vector<32x64xbf16>, vector<64x384xbf16>, vector<32x384xf32> -> vector<32x384xf32>
    %4 = vector.shape_cast %3 : vector<32x384xf32> to vector<2x16x384xf32>
    %cst_4 = arith.constant 0.000000e+00 : f32
    %5 = vector.broadcast %cst_4 : f32 to vector<2x1x128xf32>
    %6 = vector.extract_strided_slice %4 {offsets = [0, 0, 0], sizes = [2, 15, 128], strides = [1, 1, 1]} : vector<2x16x384xf32> to vector<2x15x128xf32>
    %7 = tpu.concatenate %5, %6 in 1 : vector<2x1x128xf32>, vector<2x15x128xf32> -> vector<2x16x128xf32>
    %8 = vector.extract_strided_slice %4 {offsets = [0, 0, 128], sizes = [2, 16, 128], strides = [1, 1, 1]} : vector<2x16x384xf32> to vector<2x16x128xf32>
    %9 = vector.extract_strided_slice %4 {offsets = [0, 1, 256], sizes = [2, 15, 128], strides = [1, 1, 1]} : vector<2x16x384xf32> to vector<2x15x128xf32>
    %10 = tpu.concatenate %9, %5 in 1 : vector<2x15x128xf32>, vector<2x1x128xf32> -> vector<2x16x128xf32>
    %11 = arith.addf %7, %8 : vector<2x16x128xf32>
    %12 = arith.addf %11, %10 : vector<2x16x128xf32>
    %c0_5 = arith.constant 0 : index
    %c0_6 = arith.constant 0 : index
    %13 = vector.load %arg3[%c0_5, %c0_6] : memref<1x128xf32, #tpu.memory_space<vmem>>, vector<1x128xf32>
    %14 = vector.shape_cast %13 : vector<1x128xf32> to vector<1x1x128xf32>
    %15 = vector.broadcast %14 : vector<1x1x128xf32> to vector<2x16x128xf32>
    %16 = arith.addf %12, %15 : vector<2x16x128xf32>
    %cst_7 = arith.constant 0.000000e+00 : f32
    %17 = vector.broadcast %cst_7 : f32 to vector<2x16x128xf32>
    %18 = arith.maximumf %16, %17 : vector<2x16x128xf32>
    %c0_8 = arith.constant 0 : index
    %c0_9 = arith.constant 0 : index
    %c0_10 = arith.constant 0 : index
    %19 = vector.load %arg4[%c0_8, %c0_9, %c0_10] : memref<2x16x128xf32, #tpu.memory_space<vmem>>, vector<2x16x128xf32>
    tpu.vector_store %arg4[%c0_8, %c0_9, %c0_10], %18 {strides = array<i32>} : memref<2x16x128xf32, #tpu.memory_space<vmem>>, vector<2x16x128xf32>,
    return
  }
  func.func @transform_0(%arg0: i32) -> (i32, i32, i32) {
    %c0_i32 = arith.constant 0 : i32
    %c0_i32_0 = arith.constant 0 : i32
    %c0_i32_1 = arith.constant 0 : i32
    %c0_i32_2 = arith.constant 0 : i32
    return %c0_i32, %c0_i32_0, %c0_i32_1 : i32, i32, i32
  }
  func.func @transform_1(%arg0: i32) -> (i32, i32) {
    %c0_i32 = arith.constant 0 : i32
    %c0_i32_0 = arith.constant 0 : i32
    %c0_i32_1 = arith.constant 0 : i32
    return %c0_i32, %c0_i32_0 : i32, i32
  }
  func.func @transform_2(%arg0: i32) -> (i32, i32) {
    %c0_i32 = arith.constant 0 : i32
    %c0_i32_0 = arith.constant 0 : i32
    %c0_i32_1 = arith.constant 0 : i32
    return %c0_i32, %c0_i32_0 : i32, i32
  }
  func.func @transform_3(%arg0: i32) -> (i32, i32, i32) {
    %c0_i32 = arith.constant 0 : i32
    %c0_i32_0 = arith.constant 0 : i32
    %c0_i32_1 = arith.constant 0 : i32
    %c0_i32_2 = arith.constant 0 : i32
    return %c0_i32, %c0_i32_0, %c0_i32_1 : i32, i32, i32
  }
}

</mosaic_0001>

<llo_original>
// kernel: component_forward_nhwc.1
$region0: #{component_forward_nhwc.1}
  #allocation0 [shape = 'u32[]', space=smem, size = 0x4, offset = 0x4, fixed_abs, tag = 'smem constant byte address 0x4 - core index']
  #allocation1 [shape = 'u32[144,128]{1,0:T(1,128)}', space=vmem, size = 0x12000, scoped, tag = 'internal scratch']
  %s0 = inlined_call_operand.vmem [shape: bf16[2,16,64], index: 0, kind: input, shape index: {}]
  %s1 = inlined_call_operand.vmem [shape: bf16[64,384], index: 1, kind: input, shape index: {}]
  %s2 = inlined_call_operand.vmem [shape: f32[1,128], index: 2, kind: input, shape index: {}]
  %s3 = inlined_call_operand.vmem [shape: f32[2,16,128], index: 3, kind: output, shape index: {}]
  %s4 = sld [smem:[#allocation0]]
  $region22: #{component_forward_nhwc.1} parent=0
    _
  %s6 = ssub.s32 1, %s4
  %s7 = scalar_select 0, %s6, %s4
  // Predicated region
  $region2: #{component_forward_nhwc.1} parent=0 // pred_check
    _
  $region3: #{component_forward_nhwc.1} parent=0 // pred_check_branch
    %9 = sbr.rel (0) target = $region5
  $region4: #{component_forward_nhwc.1} parent=0 // pred_region
    _
  $region5: #{component_forward_nhwc.1} parent=0 // pred_fallthru
    _
  // Predicated region
  $region6: #{component_forward_nhwc.1} parent=0 // pred_check
    _
  $region7: #{component_forward_nhwc.1} parent=0 // pred_check_branch
    %11 = sbr.rel (0) target = $region9
  $region8: #{component_forward_nhwc.1} parent=0 // pred_region
    _
  $region9: #{component_forward_nhwc.1} parent=0 // pred_fallthru
    _
  // Predicated region
  $region10: #{component_forward_nhwc.1} parent=0 // pred_check
    _
  $region11: #{component_forward_nhwc.1} parent=0 // pred_check_branch
    %13 = sbr.rel (0) target = $region13
  $region12: #{component_forward_nhwc.1} parent=0 // pred_region
    _
  $region13: #{component_forward_nhwc.1} parent=0 // pred_fallthru
    _
  %v15 = vld [vmem:[%s0] sm:$0xf]
  %v16 = vld [vmem:[%s0 + $0x4] sm:$0xf]
  %v17 = vld [vmem:[%s0 + $0x8] sm:$0xf]
  %v18 = vld [vmem:[%s0 + $0xc] sm:$0xf]
  %v19 = vld [vmem:[%s1] sm:$0xff]
  %v20 = vld [vmem:[%s1 + $0x8] sm:$0xf]
  %v21 = vld [vmem:[%s1 + $0xc] sm:$0xff]
  %v22 = vld [vmem:[%s1 + $0x14] sm:$0xf]
  %v23 = vld [vmem:[%s1 + $0x18] sm:$0xff]
  %v24 = vld [vmem:[%s1 + $0x20] sm:$0xf]
  %v25 = vld [vmem:[%s1 + $0x24] sm:$0xff]
  %v26 = vld [vmem:[%s1 + $0x2c] sm:$0xf]
  %v27 = vld [vmem:[%s1 + $0x30] sm:$0xff]
  %v28 = vld [vmem:[%s1 + $0x38] sm:$0xf]
  %v29 = vld [vmem:[%s1 + $0x3c] sm:$0xff]
  %v30 = vld [vmem:[%s1 + $0x44] sm:$0xf]
  %v31 = vld [vmem:[%s1 + $0x48] sm:$0xff]
  %v32 = vld [vmem:[%s1 + $0x50] sm:$0xf]
  %v33 = vld [vmem:[%s1 + $0x54] sm:$0xff]
  %v34 = vld [vmem:[%s1 + $0x5c] sm:$0xf]
  %v39 = vunpack.c.l.b16 %v15
  %v40 = vunpack.c.l.b16 %v16
  %v41 = vunpack.c.l.b16 %v17
  %v42 = vunpack.c.l.b16 %v18
  %v43 = vpack.c.b16 %v40, %v39
  %v44 = vpack.c.b16 %v42, %v41
  %v61 = vunpack.c.l.b16 %v19
  %v62 = vunpack.c.h.b16 %v19
  %v63 = vunpack.c.l.b16 %v20
  %v64 = vunpack.c.l.b16 %v21
  %v65 = vunpack.c.h.b16 %v21
  %v66 = vunpack.c.l.b16 %v22
  %v67 = vunpack.c.l.b16 %v23
  %v68 = vunpack.c.h.b16 %v23
  %v69 = vunpack.c.l.b16 %v24
  %v70 = vunpack.c.l.b16 %v25
  %v71 = vunpack.c.h.b16 %v25
  %v72 = vunpack.c.l.b16 %v26
  %v73 = vunpack.c.l.b16 %v27
  %v74 = vunpack.c.h.b16 %v27
  %v75 = vunpack.c.l.b16 %v28
  %v76 = vunpack.c.l.b16 %v29
  %v77 = vunpack.c.h.b16 %v29
  %v78 = vunpack.c.l.b16 %v30
  %v79 = vunpack.c.l.b16 %v31
  %v80 = vunpack.c.h.b16 %v31
  %v81 = vunpack.c.l.b16 %v32
  %v82 = vunpack.c.l.b16 %v33
  %v83 = vunpack.c.h.b16 %v33
  %v84 = vunpack.c.l.b16 %v34
  %v85 = vpack.c.b16 %v64, %v61
  %v86 = vpack.c.b16 %v65, %v62
  %v87 = vpack.c.b16 %v66, %v63
  %v88 = vpack.c.b16 %v70, %v67
  %v89 = vpack.c.b16 %v71, %v68
  %v90 = vpack.c.b16 %v72, %v69
  %v91 = vpack.c.b16 %v76, %v73
  %v92 = vpack.c.b16 %v77, %v74
  %v93 = vpack.c.b16 %v78, %v75
  %v94 = vpack.c.b16 %v82, %v79
  %v95 = vpack.c.b16 %v83, %v80
  %v96 = vpack.c.b16 %v84, %v81
  %vm109 = vcmask 523264
  %v111 = vsel %vm109, %v43, 0
  %v114 = vsel %vm109, %v44, 0
  %116 = vmatprep.subr.bf16.mxu0 0
  %117 = vmatpush1.bf16.msra.mxu0 0
  %118 = vmatprep.subr.bf16.mxu0 0
  %119 = vmatpush1.bf16.msra.mxu0 0
  %120 = vmatprep.subr.bf16.mxu0 0
  %121 = vmatpush1.bf16.msra.mxu0 0
  %122 = vmatprep.subr.bf16.mxu0 0
  %123 = vmatpush1.bf16.msra.mxu0 0
  %124 = vmatprep.subr.bf16.mxu0 %v95
  %125 = vmatpush1.bf16.msra.mxu0 %v94
  %126 = vmatprep.subr.bf16.mxu0 %v92
  %127 = vmatpush1.bf16.msra.mxu0 %v91
  %128 = vmatprep.subr.bf16.mxu0 %v89
  %129 = vmatpush1.bf16.msra.mxu0 %v88
  %130 = vmatprep.subr.bf16.mxu0 %v86
  %131 = vmatpush1.bf16.msra.mxu0 %v85
  %132 = vmatprep.subr.bf16.mxu0 0
  %133 = vmatpush2.bf16.msra.mxu0 0
  %134 = vmatprep.subr.bf16.mxu0 0
  %135 = vmatpush2.bf16.msra.mxu0 0
  %136 = vmatprep.subr.bf16.mxu0 0
  %137 = vmatpush2.bf16.msra.mxu0 0
  %138 = vmatprep.subr.bf16.mxu0 0
  %139 = vmatpush2.bf16.msra.mxu0 0
  %140 = vmatprep.subr.bf16.mxu0 0
  %141 = vmatpush2.bf16.msra.mxu0 0
  %142 = vmatprep.subr.bf16.mxu0 0
  %143 = vmatpush2.bf16.msra.mxu0 0
  %144 = vmatprep.subr.bf16.mxu0 0
  %145 = vmatpush2.bf16.msra.mxu0 0
  %146 = vmatprep.subr.bf16.mxu0 0
  %147 = vmatpush2.bf16.msra.mxu0 0
  %148 = vmatprep.mubr.bf16.mxu0 0
  %149 = vmatmul.mubr.bf16.gmra.mxu0 %v111
  %v150 = vpop.f32.mrf.mxu0
  %v151 = vadd.f32 0.0, %v150
  %v152 = vpop.f32.mrf.mxu0
  %v153 = vadd.f32 0.0, %v152
  %v154 = vpop.f32.mrf.mxu0
  %v155 = vadd.f32 0.0, %v154
  %v156 = vpop.f32.mrf.mxu0
  %v157 = vadd.f32 0.0, %v156
  %158 = vmatprep.mubr.bf16.mxu0 0
  %159 = vmatmul.mubr.bf16.gmra.mxu0 %v114
  %v160 = vpop.f32.mrf.mxu0
  %v161 = vadd.f32 0.0, %v160
  %v162 = vpop.f32.mrf.mxu0
  %v163 = vadd.f32 0.0, %v162
  %v164 = vpop.f32.mrf.mxu0
  %v165 = vadd.f32 0.0, %v164
  %v166 = vpop.f32.mrf.mxu0
  %v167 = vadd.f32 0.0, %v166
  %168 = vdwg.mxu0
  %169 = vmatprep.subr.bf16.mxu0 0
  %170 = vmatpush1.bf16.msra.mxu0 0
  %171 = vmatprep.subr.bf16.mxu0 0
  %172 = vmatpush1.bf16.msra.mxu0 0
  %173 = vmatprep.subr.bf16.mxu0 0
  %174 = vmatpush1.bf16.msra.mxu0 0
  %175 = vmatprep.subr.bf16.mxu0 0
  %176 = vmatpush1.bf16.msra.mxu0 0
  %177 = vmatprep.subr.bf16.mxu0 0
  %178 = vmatpush1.bf16.msra.mxu0 %v96
  %179 = vmatprep.subr.bf16.mxu0 0
  %180 = vmatpush1.bf16.msra.mxu0 %v93
  %181 = vmatprep.subr.bf16.mxu0 0
  %182 = vmatpush1.bf16.msra.mxu0 %v90
  %183 = vmatprep.subr.bf16.mxu0 0
  %184 = vmatpush1.bf16.msra.mxu0 %v87
  %185 = vmatprep.subr.bf16.mxu0 0
  %186 = vmatpush2.bf16.msra.mxu0 0
  %187 = vmatprep.subr.bf16.mxu0 0
  %188 = vmatpush2.bf16.msra.mxu0 0
  %189 = vmatprep.subr.bf16.mxu0 0
  %190 = vmatpush2.bf16.msra.mxu0 0
  %191 = vmatprep.subr.bf16.mxu0 0
  %192 = vmatpush2.bf16.msra.mxu0 0
  %193 = vmatprep.subr.bf16.mxu0 0
  %194 = vmatpush2.bf16.msra.mxu0 0
  %195 = vmatprep.subr.bf16.mxu0 0
  %196 = vmatpush2.bf16.msra.mxu0 0
  %197 = vmatprep.subr.bf16.mxu0 0
  %198 = vmatpush2.bf16.msra.mxu0 0
  %199 = vmatprep.subr.bf16.mxu0 0
  %200 = vmatpush2.bf16.msra.mxu0 0
  %201 = vmatprep.mubr.bf16.mxu0 0
  %202 = vmatmul.mubr.bf16.gmra.mxu0 %v111
  %v203 = vpop.f32.mrf.mxu0
  %v204 = vadd.f32 0.0, %v203
  %v205 = vpop.f32.mrf.mxu0
  %v206 = vpop.f32.mrf.mxu0
  %v207 = vadd.f32 0.0, %v206
  %v208 = vpop.f32.mrf.mxu0
  %209 = vmatprep.mubr.bf16.mxu0 0
  %210 = vmatmul.mubr.bf16.gmra.mxu0 %v114
  %v211 = vpop.f32.mrf.mxu0
  %v212 = vadd.f32 0.0, %v211
  %v213 = vpop.f32.mrf.mxu0
  %v214 = vpop.f32.mrf.mxu0
  %v215 = vadd.f32 0.0, %v214
  %v216 = vpop.f32.mrf.mxu0
  %217 = vdwg.mxu0
  %vm222 = vcmask 1040384
  %v223 = vrot.slane %v151, 7
  %v224 = vrot.slane %v155, 7
  %v225 = vsel %vm222, %v223, %v224
  %v226 = vrot.slane %v161, 7
  %v227 = vrot.slane %v165, 7
  %v228 = vsel %vm222, %v226, %v227
  %v233 = vsel %vm222, 0.0, %v223
  %v234 = vsel %vm222, 0.0, %v226
  %vm239 = vcmask 1046528
  %v240 = vrot.slane %v204, 1
  %v241 = vrot.slane %v207, 1
  %v242 = vsel %vm239, %v240, %v241
  %v243 = vrot.slane %v212, 1
  %v244 = vrot.slane %v215, 1
  %v245 = vsel %vm239, %v243, %v244
  %v250 = vsel %vm239, %v241, 0.0
  %v251 = vsel %vm239, %v244, 0.0
  %v252 = vadd.f32 %v233, %v153
  %v253 = vadd.f32 %v225, %v157
  %v254 = vadd.f32 %v234, %v163
  %v255 = vadd.f32 %v228, %v167
  %v256 = vadd.f32 %v252, %v242
  %v257 = vadd.f32 %v253, %v250
  %v258 = vadd.f32 %v254, %v245
  %v259 = vadd.f32 %v255, %v251
  %v260 = vld [vmem:[%s2] sm:$0x1]
  %v262 = vlaneseq
  %v263 = vshrl.u32 %v262, 7
  %v264 = vsub.s32 0, %v263
  %v265 = vrot.slane %v260, %v264
  %v267 = vadd.f32 %v256, %v265
  %v268 = vadd.f32 %v257, %v265
  %v269 = vadd.f32 %v258, %v265
  %v270 = vadd.f32 %v259, %v265
  %v271 = vmax.f32 %v267, 0.0
  %v272 = vmax.f32 %v268, 0.0
  %v273 = vmax.f32 %v269, 0.0
  %v274 = vmax.f32 %v270, 0.0
  %275 = vst [vmem:[%s3] sm:$0xff] %v271
  %276 = vst [vmem:[%s3 + $0x8] sm:$0xff] %v272
  %277 = vst [vmem:[%s3 + $0x10] sm:$0xff] %v273
  %278 = vst [vmem:[%s3 + $0x18] sm:$0xff] %v274
  // Predicated region
  $region14: #{component_forward_nhwc.1} parent=0 // pred_check
    _
  $region15: #{component_forward_nhwc.1} parent=0 // pred_check_branch
    %280 = sbr.rel (0) target = $region17
  $region16: #{component_forward_nhwc.1} parent=0 // pred_region
    _
  $region17: #{component_forward_nhwc.1} parent=0 // pred_fallthru
    _
  // Predicated region
  $region18: #{component_forward_nhwc.1} parent=0 // pred_check
    _
  $region19: #{component_forward_nhwc.1} parent=0 // pred_check_branch
    %282 = sbr.rel (0) target = $region21
  $region20: #{component_forward_nhwc.1} parent=0 // pred_region
    _
  $region21: #{component_forward_nhwc.1} parent=0 // pred_fallthru
    _

</llo_original>
